<compile_context>
chip_gen: v7x
topology: tpu7x:2x2x1
jax: 0.10.0
libtpu: 0.0.40
codegen_flags: <defaults>
</compile_context>

<pallas_src>
import jax
import jax.numpy as jnp
from jax import lax
from jax.experimental import pallas as pl
from jax.experimental.pallas import tpu as pltpu  # noqa: F401  (imported for parity; no TPU-specific params needed at this size)


def make_lstm_kernel(seq_len, input_size, hidden, output):
    four_h = 4 * hidden
    # Static row offsets into the packed parameter slab.
    r_wih = 0
    r_whh = r_wih + input_size
    r_b = r_whh + hidden
    r_wlin = r_b + 1
    r_blin = r_wlin + hidden

    def kernel(x_ref, p_ref, out_ref):
        # --- one-time loads (static sublane slices of the packed slab) -------
        x = x_ref[...]                              # (T, I)
        w_ih = p_ref[r_wih:r_whh, :]                # (I, 4H)
        w_hh = p_ref[r_whh:r_b, :]                  # (H, 4H)
        b = p_ref[r_b:r_b + 1, :]                   # (1, 4H)
        w_lin = p_ref[r_wlin:r_blin, :]             # (H, 4H)  cols >= output are 0
        b_lin = p_ref[r_blin:r_blin + 1, :]         # (1, 4H)  cols >= output are 0

        # --- input projection for ALL time steps (off the serial path) -------
        # (T, I) @ (I, 4H) + (1, 4H) -> (T, 4H)
        xw = jnp.dot(x, w_ih, preferred_element_type=jnp.float32) + b

        # --- hoisted gate-fixup constants: sigmoid(z) = 0.5*(1 + tanh(z/2)) --
        # lanes [0,2H) = i,f (sigmoid), [2H,3H) = g (tanh), [3H,4H) = o (sigmoid)
        lane = lax.broadcasted_iota(jnp.int32, (1, four_h), 1)
        is_tanh_lane = (lane >= 2 * hidden) & (lane < 3 * hidden)
        pre_scale = jnp.where(is_tanh_lane, 1.0, 0.5).astype(jnp.float32)
        post_mul = pre_scale                        # 0.5 on sigmoid lanes, 1 on g
        post_add = jnp.where(is_tanh_lane, 0.0, 0.5).astype(jnp.float32)

        h = jnp.zeros((1, hidden), jnp.float32)
        c = jnp.zeros((1, hidden), jnp.float32)

        # Fully static (Python-unrolled) recurrence: seq_len = 8 steps.
        for t in range(seq_len):
            # Only the h-path is sequential: one fused (1,H)x(H,4H) matmul.
            z = (jnp.dot(h, w_hh, preferred_element_type=jnp.float32)
                 + xw[t:t + 1, :])                  # (1, 4H), static row slice
            # Single full-vreg EUP pass for all four gates.
            y = jnp.tanh(z * pre_scale)
            gates = y * post_mul + post_add         # i,f,o = sigmoid(z); g = tanh(z)
            i_g = gates[:, 0 * hidden:1 * hidden]
            f_g = gates[:, 1 * hidden:2 * hidden]
            g_g = gates[:, 2 * hidden:3 * hidden]
            o_g = gates[:, 3 * hidden:4 * hidden]
            c = f_g * c + i_g * g_g
            h = o_g * jnp.tanh(c)

        # Final linear layer on the last hidden state; padded cols are zero so
        # the first `output` lanes of the lane-dense result are the answer.
        res = jnp.dot(h, w_lin, preferred_element_type=jnp.float32) + b_lin
        out_ref[...] = res[:, :output].astype(out_ref.dtype)

    return kernel


def pack_lstm_params(w_ih, w_hh, b_ih, b_hh, w_lin, b_lin):
    """One-time repack of PyTorch-layout params into a single lane-dense slab.

    Layout (rows x 4H lanes):
      [0        : I        )  w_ih^T           (I, 4H)
      [I        : I+H      )  w_hh^T           (H, 4H)
      [I+H      : I+H+1    )  b_ih + b_hh      (1, 4H)
      [I+H+1    : I+2H+1   )  w_lin^T padded   (H, 4H)   (cols >= O are zero)
      [I+2H+1   : I+2H+2   )  b_lin padded     (1, 4H)
      remaining rows: zero padding up to a multiple of 8 sublanes.
    """
    four_h, input_size = w_ih.shape
    hidden = four_h // 4
    output = w_lin.shape[0]

    w_ih_k = w_ih.T.astype(jnp.float32)                               # (I, 4H)
    w_hh_k = w_hh.T.astype(jnp.float32)                               # (H, 4H)
    b_k = (b_ih + b_hh).reshape(1, four_h).astype(jnp.float32)        # (1, 4H)
    w_lin_k = jnp.zeros((hidden, four_h), jnp.float32)
    w_lin_k = w_lin_k.at[:, :output].set(w_lin.T.astype(jnp.float32))  # (H, 4H)
    b_lin_k = jnp.zeros((1, four_h), jnp.float32)
    b_lin_k = b_lin_k.at[:, :output].set(b_lin.reshape(1, output).astype(jnp.float32))

    rows = input_size + hidden + 1 + hidden + 1
    rows_padded = -(-rows // 8) * 8
    pad = jnp.zeros((rows_padded - rows, four_h), jnp.float32)
    return jnp.concatenate([w_ih_k, w_hh_k, b_k, w_lin_k, b_lin_k, pad], axis=0)


def lstm_model_forward(x, packed_params, input_size, hidden, output):
    """x: (seq_len, input_size). Returns predictions[-1], shape (output,)."""
    seq_len = x.shape[0]
    kernel = make_lstm_kernel(seq_len, input_size, hidden, output)
    # No grid: x (~128 B) + packed params (~36 KiB) are DMA'd to VMEM once and
    # the whole recurrence runs inside the kernel.
    out = pl.pallas_call(
        kernel,
        out_shape=jax.ShapeDtypeStruct((1, output), jnp.float32),
    )(x.astype(jnp.float32), packed_params)
    return out[0]


def lstm_model_reference(x, w_ih, w_hh, b_ih, b_hh, w_lin, b_lin):
    """Pure-JAX reference matching torch.nn.LSTM + nn.Linear semantics."""
    hidden = w_hh.shape[1]

    def step(carry, xt):
        h, c = carry
        gates = xt @ w_ih.T + b_ih + h @ w_hh.T + b_hh
        i, f, g, o = jnp.split(gates, 4)
        i = jax.nn.sigmoid(i)
        f = jax.nn.sigmoid(f)
        g = jnp.tanh(g)
        o = jax.nn.sigmoid(o)
        c = f * c + i * g
        h = o * jnp.tanh(c)
        return (h, c), h

    (h, c), hs = lax.scan(step, (jnp.zeros(hidden), jnp.zeros(hidden)), x)
    preds = hs @ w_lin.T + b_lin
    return preds[-1]


if __name__ == "__main__":
    seq_len = 8
    input_size = 4
    hidden_layer_size = 32
    output_size = 4

    key = jax.random.PRNGKey(0)
    ks = jax.random.split(key, 8)
    k_lstm = 1.0 / jnp.sqrt(hidden_layer_size)
    k_lin = 1.0 / jnp.sqrt(hidden_layer_size)

    # PyTorch-layout parameters (deterministic init, uniform(-k, k) like nn.LSTM).
    w_ih = jax.random.uniform(ks[0], (4 * hidden_layer_size, input_size),
                              jnp.float32, -k_lstm, k_lstm)
    w_hh = jax.random.uniform(ks[1], (4 * hidden_layer_size, hidden_layer_size),
                              jnp.float32, -k_lstm, k_lstm)
    b_ih = jax.random.uniform(ks[2], (4 * hidden_layer_size,),
                              jnp.float32, -k_lstm, k_lstm)
    b_hh = jax.random.uniform(ks[3], (4 * hidden_layer_size,),
                              jnp.float32, -k_lstm, k_lstm)
    w_lin = jax.random.uniform(ks[4], (output_size, hidden_layer_size),
                               jnp.float32, -k_lin, k_lin)
    b_lin = jax.random.uniform(ks[5], (output_size,),
                               jnp.float32, -k_lin, k_lin)

    x = jax.random.normal(ks[6], (seq_len, input_size), jnp.float32)

    # One-time (model-load-time) weight packing, off the per-call path.
    packed = pack_lstm_params(w_ih, w_hh, b_ih, b_hh, w_lin, b_lin)
    packed = jax.block_until_ready(packed)

    out = lstm_model_forward(x, packed, input_size, hidden_layer_size, output_size)
    out = jax.block_until_ready(out)

    ref = lstm_model_reference(x, w_ih, w_hh, b_ih, b_hh, w_lin, b_lin)
    ref = jax.block_until_ready(ref)

    assert out.shape == (output_size,)
    assert jnp.allclose(out, ref, atol=1e-5, rtol=1e-5), (out, ref)
    print("KERNEL_OK")
</pallas_src>

<mosaic_0001>
module attributes {stable_mosaic.version = 11 : i64} {
  func.func @kernel(%arg0: memref<8x4xf32, #tpu.memory_space<vmem>>, %arg1: memref<72x128xf32, #tpu.memory_space<vmem>>, %arg2: memref<1x4xf32, #tpu.memory_space<vmem>>) attributes {dimension_semantics = [], scalar_prefetch = 0 : i64, scratch_operands = 0 : i64, tpu.core_type = #tpu.core_type<tc>} {
    %c0 = arith.constant 0 : index
    %c0_0 = arith.constant 0 : index
    %0 = vector.load %arg0[%c0, %c0_0] : memref<8x4xf32, #tpu.memory_space<vmem>>, vector<8x4xf32>
    %c0_1 = arith.constant 0 : index
    %c0_2 = arith.constant 0 : index
    %1 = vector.load %arg1[%c0_1, %c0_2] : memref<72x128xf32, #tpu.memory_space<vmem>>, vector<4x128xf32>
    %c4 = arith.constant 4 : index
    %c0_3 = arith.constant 0 : index
    %2 = vector.load %arg1[%c4, %c0_3] : memref<72x128xf32, #tpu.memory_space<vmem>>, vector<32x128xf32>
    %c36 = arith.constant 36 : index
    %c0_4 = arith.constant 0 : index
    %3 = vector.load %arg1[%c36, %c0_4] : memref<72x128xf32, #tpu.memory_space<vmem>>, vector<1x128xf32>
    %c37 = arith.constant 37 : index
    %c0_5 = arith.constant 0 : index
    %4 = vector.load %arg1[%c37, %c0_5] : memref<72x128xf32, #tpu.memory_space<vmem>>, vector<32x128xf32>
    %c69 = arith.constant 69 : index
    %c0_6 = arith.constant 0 : index
    %5 = vector.load %arg1[%c69, %c0_6] : memref<72x128xf32, #tpu.memory_space<vmem>>, vector<1x128xf32>
    %cst = arith.constant dense<0.000000e+00> : vector<8x128xf32>
    %6 = tpu.matmul %0, %1, %cst {dimension_numbers = #tpu.dot_dimension_numbers<[1], [0], [0], [1], [0, 0, 1, 1], [], []>} : vector<8x4xf32>, vector<4x128xf32>, vector<8x128xf32> -> vector<8x128xf32>
    %7 = vector.broadcast %3 : vector<1x128xf32> to vector<8x128xf32>
    %8 = arith.addf %6, %7 : vector<8x128xf32>
    %9 = tpu.iota {dimensions = array<i32: 1>} : vector<1x128xi32>
    %c64_i32 = arith.constant 64 : i32
    %10 = vector.broadcast %c64_i32 : i32 to vector<1x128xi32>
    %11 = arith.cmpi sge, %9, %10 : vector<1x128xi32>
    %c96_i32 = arith.constant 96 : i32
    %12 = vector.broadcast %c96_i32 : i32 to vector<1x128xi32>
    %13 = arith.cmpi slt, %9, %12 : vector<1x128xi32>
    %14 = arith.andi %11, %13 : vector<1x128xi1>
    %cst_7 = arith.constant 1.000000e+00 : f32
    %cst_8 = arith.constant 5.000000e-01 : f32
    %15 = vector.broadcast %cst_7 : f32 to vector<1x128xf32>
    %16 = vector.broadcast %cst_8 : f32 to vector<1x128xf32>
    %17 = arith.select %14, %15, %16 : vector<1x128xi1>, vector<1x128xf32>
    %cst_9 = arith.constant 0.000000e+00 : f32
    %cst_10 = arith.constant 5.000000e-01 : f32
    %18 = vector.broadcast %cst_9 : f32 to vector<1x128xf32>
    %19 = vector.broadcast %cst_10 : f32 to vector<1x128xf32>
    %20 = arith.select %14, %18, %19 : vector<1x128xi1>, vector<1x128xf32>
    %cst_11 = arith.constant 0.000000e+00 : f32
    %21 = vector.broadcast %cst_11 : f32 to vector<1x32xf32>
    %cst_12 = arith.constant 0.000000e+00 : f32
    %22 = vector.broadcast %cst_12 : f32 to vector<1x32xf32>
    %cst_13 = arith.constant dense<0.000000e+00> : vector<1x128xf32>
    %23 = tpu.matmul %21, %2, %cst_13 {dimension_numbers = #tpu.dot_dimension_numbers<[1], [0], [0], [1], [0, 0, 1, 1], [], []>} : vector<1x32xf32>, vector<32x128xf32>, vector<1x128xf32> -> vector<1x128xf32>
    %24 = vector.extract_strided_slice %8 {offsets = [0, 0], sizes = [1, 128], strides = [1, 1]} : vector<8x128xf32> to vector<1x128xf32>
    %25 = arith.addf %23, %24 : vector<1x128xf32>
    %26 = arith.mulf %25, %17 : vector<1x128xf32>
    %27 = math.tanh %26 : vector<1x128xf32>
    %28 = arith.mulf %27, %17 : vector<1x128xf32>
    %29 = arith.addf %28, %20 : vector<1x128xf32>
    %30 = vector.extract_strided_slice %29 {offsets = [0, 0], sizes = [1, 32], strides = [1, 1]} : vector<1x128xf32> to vector<1x32xf32>
    %31 = vector.extract_strided_slice %29 {offsets = [0, 32], sizes = [1, 32], strides = [1, 1]} : vector<1x128xf32> to vector<1x32xf32>
    %32 = vector.extract_strided_slice %29 {offsets = [0, 64], sizes = [1, 32], strides = [1, 1]} : vector<1x128xf32> to vector<1x32xf32>
    %33 = vector.extract_strided_slice %29 {offsets = [0, 96], sizes = [1, 32], strides = [1, 1]} : vector<1x128xf32> to vector<1x32xf32>
    %34 = arith.mulf %31, %22 : vector<1x32xf32>
    %35 = arith.mulf %30, %32 : vector<1x32xf32>
    %36 = arith.addf %34, %35 : vector<1x32xf32>
    %37 = math.tanh %36 : vector<1x32xf32>
    %38 = arith.mulf %33, %37 : vector<1x32xf32>
    %cst_14 = arith.constant dense<0.000000e+00> : vector<1x128xf32>
    %39 = tpu.matmul %38, %2, %cst_14 {dimension_numbers = #tpu.dot_dimension_numbers<[1], [0], [0], [1], [0, 0, 1, 1], [], []>} : vector<1x32xf32>, vector<32x128xf32>, vector<1x128xf32> -> vector<1x128xf32>
    %40 = vector.extract_strided_slice %8 {offsets = [1, 0], sizes = [1, 128], strides = [1, 1]} : vector<8x128xf32> to vector<1x128xf32>
    %41 = arith.addf %39, %40 : vector<1x128xf32>
    %42 = arith.mulf %41, %17 : vector<1x128xf32>
    %43 = math.tanh %42 : vector<1x128xf32>
    %44 = arith.mulf %43, %17 : vector<1x128xf32>
    %45 = arith.addf %44, %20 : vector<1x128xf32>
    %46 = vector.extract_strided_slice %45 {offsets = [0, 0], sizes = [1, 32], strides = [1, 1]} : vector<1x128xf32> to vector<1x32xf32>
    %47 = vector.extract_strided_slice %45 {offsets = [0, 32], sizes = [1, 32], strides = [1, 1]} : vector<1x128xf32> to vector<1x32xf32>
    %48 = vector.extract_strided_slice %45 {offsets = [0, 64], sizes = [1, 32], strides = [1, 1]} : vector<1x128xf32> to vector<1x32xf32>
    %49 = vector.extract_strided_slice %45 {offsets = [0, 96], sizes = [1, 32], strides = [1, 1]} : vector<1x128xf32> to vector<1x32xf32>
    %50 = arith.mulf %47, %36 : vector<1x32xf32>
    %51 = arith.mulf %46, %48 : vector<1x32xf32>
    %52 = arith.addf %50, %51 : vector<1x32xf32>
    %53 = math.tanh %52 : vector<1x32xf32>
    %54 = arith.mulf %49, %53 : vector<1x32xf32>
    %cst_15 = arith.constant dense<0.000000e+00> : vector<1x128xf32>
    %55 = tpu.matmul %54, %2, %cst_15 {dimension_numbers = #tpu.dot_dimension_numbers<[1], [0], [0], [1], [0, 0, 1, 1], [], []>} : vector<1x32xf32>, vector<32x128xf32>, vector<1x128xf32> -> vector<1x128xf32>
    %56 = vector.extract_strided_slice %8 {offsets = [2, 0], sizes = [1, 128], strides = [1, 1]} : vector<8x128xf32> to vector<1x128xf32>
    %57 = arith.addf %55, %56 : vector<1x128xf32>
    %58 = arith.mulf %57, %17 : vector<1x128xf32>
    %59 = math.tanh %58 : vector<1x128xf32>
    %60 = arith.mulf %59, %17 : vector<1x128xf32>
    %61 = arith.addf %60, %20 : vector<1x128xf32>
    %62 = vector.extract_strided_slice %61 {offsets = [0, 0], sizes = [1, 32], strides = [1, 1]} : vector<1x128xf32> to vector<1x32xf32>
    %63 = vector.extract_strided_slice %61 {offsets = [0, 32], sizes = [1, 32], strides = [1, 1]} : vector<1x128xf32> to vector<1x32xf32>
    %64 = vector.extract_strided_slice %61 {offsets = [0, 64], sizes = [1, 32], strides = [1, 1]} : vector<1x128xf32> to vector<1x32xf32>
    %65 = vector.extract_strided_slice %61 {offsets = [0, 96], sizes = [1, 32], strides = [1, 1]} : vector<1x128xf32> to vector<1x32xf32>
    %66 = arith.mulf %63, %52 : vector<1x32xf32>
    %67 = arith.mulf %62, %64 : vector<1x32xf32>
    %68 = arith.addf %66, %67 : vector<1x32xf32>
    %69 = math.tanh %68 : vector<1x32xf32>
    %70 = arith.mulf %65, %69 : vector<1x32xf32>
    %cst_16 = arith.constant dense<0.000000e+00> : vector<1x128xf32>
    %71 = tpu.matmul %70, %2, %cst_16 {dimension_numbers = #tpu.dot_dimension_numbers<[1], [0], [0], [1], [0, 0, 1, 1], [], []>} : vector<1x32xf32>, vector<32x128xf32>, vector<1x128xf32> -> vector<1x128xf32>
    %72 = vector.extract_strided_slice %8 {offsets = [3, 0], sizes = [1, 128], strides = [1, 1]} : vector<8x128xf32> to vector<1x128xf32>
    %73 = arith.addf %71, %72 : vector<1x128xf32>
    %74 = arith.mulf %73, %17 : vector<1x128xf32>
    %75 = math.tanh %74 : vector<1x128xf32>
    %76 = arith.mulf %75, %17 : vector<1x128xf32>
    %77 = arith.addf %76, %20 : vector<1x128xf32>
    %78 = vector.extract_strided_slice %77 {offsets = [0, 0], sizes = [1, 32], strides = [1, 1]} : vector<1x128xf32> to vector<1x32xf32>
    %79 = vector.extract_strided_slice %77 {offsets = [0, 32], sizes = [1, 32], strides = [1, 1]} : vector<1x128xf32> to vector<1x32xf32>
    %80 = vector.extract_strided_slice %77 {offsets = [0, 64], sizes = [1, 32], strides = [1, 1]} : vector<1x128xf32> to vector<1x32xf32>
    %81 = vector.extract_strided_slice %77 {offsets = [0, 96], sizes = [1, 32], strides = [1, 1]} : vector<1x128xf32> to vector<1x32xf32>
    %82 = arith.mulf %79, %68 : vector<1x32xf32>
    %83 = arith.mulf %78, %80 : vector<1x32xf32>
    %84 = arith.addf %82, %83 : vector<1x32xf32>
    %85 = math.tanh %84 : vector<1x32xf32>
    %86 = arith.mulf %81, %85 : vector<1x32xf32>
    %cst_17 = arith.constant dense<0.000000e+00> : vector<1x128xf32>
    %87 = tpu.matmul %86, %2, %cst_17 {dimension_numbers = #tpu.dot_dimension_numbers<[1], [0], [0], [1], [0, 0, 1, 1], [], []>} : vector<1x32xf32>, vector<32x128xf32>, vector<1x128xf32> -> vector<1x128xf32>
    %88 = vector.extract_strided_slice %8 {offsets = [4, 0], sizes = [1, 128], strides = [1, 1]} : vector<8x128xf32> to vector<1x128xf32>
    %89 = arith.addf %87, %88 : vector<1x128xf32>
    %90 = arith.mulf %89, %17 : vector<1x128xf32>
    %91 = math.tanh %90 : vector<1x128xf32>
    %92 = arith.mulf %91, %17 : vector<1x128xf32>
    %93 = arith.addf %92, %20 : vector<1x128xf32>
    %94 = vector.extract_strided_slice %93 {offsets = [0, 0], sizes = [1, 32], strides = [1, 1]} : vector<1x128xf32> to vector<1x32xf32>
    %95 = vector.extract_strided_slice %93 {offsets = [0, 32], sizes = [1, 32], strides = [1, 1]} : vector<1x128xf32> to vector<1x32xf32>
    %96 = vector.extract_strided_slice %93 {offsets = [0, 64], sizes = [1, 32], strides = [1, 1]} : vector<1x128xf32> to vector<1x32xf32>
    %97 = vector.extract_strided_slice %93 {offsets = [0, 96], sizes = [1, 32], strides = [1, 1]} : vector<1x128xf32> to vector<1x32xf32>
    %98 = arith.mulf %95, %84 : vector<1x32xf32>
    %99 = arith.mulf %94, %96 : vector<1x32xf32>
    %100 = arith.addf %98, %99 : vector<1x32xf32>
    %101 = math.tanh %100 : vector<1x32xf32>
    %102 = arith.mulf %97, %101 : vector<1x32xf32>
    %cst_18 = arith.constant dense<0.000000e+00> : vector<1x128xf32>
    %103 = tpu.matmul %102, %2, %cst_18 {dimension_numbers = #tpu.dot_dimension_numbers<[1], [0], [0], [1], [0, 0, 1, 1], [], []>} : vector<1x32xf32>, vector<32x128xf32>, vector<1x128xf32> -> vector<1x128xf32>
    %104 = vector.extract_strided_slice %8 {offsets = [5, 0], sizes = [1, 128], strides = [1, 1]} : vector<8x128xf32> to vector<1x128xf32>
    %105 = arith.addf %103, %104 : vector<1x128xf32>
    %106 = arith.mulf %105, %17 : vector<1x128xf32>
    %107 = math.tanh %106 : vector<1x128xf32>
    %108 = arith.mulf %107, %17 : vector<1x128xf32>
    %109 = arith.addf %108, %20 : vector<1x128xf32>
    %110 = vector.extract_strided_slice %109 {offsets = [0, 0], sizes = [1, 32], strides = [1, 1]} : vector<1x128xf32> to vector<1x32xf32>
    %111 = vector.extract_strided_slice %109 {offsets = [0, 32], sizes = [1, 32], strides = [1, 1]} : vector<1x128xf32> to vector<1x32xf32>
    %112 = vector.extract_strided_slice %109 {offsets = [0, 64], sizes = [1, 32], strides = [1, 1]} : vector<1x128xf32> to vector<1x32xf32>
    %113 = vector.extract_strided_slice %109 {offsets = [0, 96], sizes = [1, 32], strides = [1, 1]} : vector<1x128xf32> to vector<1x32xf32>
    %114 = arith.mulf %111, %100 : vector<1x32xf32>
    %115 = arith.mulf %110, %112 : vector<1x32xf32>
    %116 = arith.addf %114, %115 : vector<1x32xf32>
    %117 = math.tanh %116 : vector<1x32xf32>
    %118 = arith.mulf %113, %117 : vector<1x32xf32>
    %cst_19 = arith.constant dense<0.000000e+00> : vector<1x128xf32>
    %119 = tpu.matmul %118, %2, %cst_19 {dimension_numbers = #tpu.dot_dimension_numbers<[1], [0], [0], [1], [0, 0, 1, 1], [], []>} : vector<1x32xf32>, vector<32x128xf32>, vector<1x128xf32> -> vector<1x128xf32>
    %120 = vector.extract_strided_slice %8 {offsets = [6, 0], sizes = [1, 128], strides = [1, 1]} : vector<8x128xf32> to vector<1x128xf32>
    %121 = arith.addf %119, %120 : vector<1x128xf32>
    %122 = arith.mulf %121, %17 : vector<1x128xf32>
    %123 = math.tanh %122 : vector<1x128xf32>
    %124 = arith.mulf %123, %17 : vector<1x128xf32>
    %125 = arith.addf %124, %20 : vector<1x128xf32>
    %126 = vector.extract_strided_slice %125 {offsets = [0, 0], sizes = [1, 32], strides = [1, 1]} : vector<1x128xf32> to vector<1x32xf32>
    %127 = vector.extract_strided_slice %125 {offsets = [0, 32], sizes = [1, 32], strides = [1, 1]} : vector<1x128xf32> to vector<1x32xf32>
    %128 = vector.extract_strided_slice %125 {offsets = [0, 64], sizes = [1, 32], strides = [1, 1]} : vector<1x128xf32> to vector<1x32xf32>
    %129 = vector.extract_strided_slice %125 {offsets = [0, 96], sizes = [1, 32], strides = [1, 1]} : vector<1x128xf32> to vector<1x32xf32>
    %130 = arith.mulf %127, %116 : vector<1x32xf32>
    %131 = arith.mulf %126, %128 : vector<1x32xf32>
    %132 = arith.addf %130, %131 : vector<1x32xf32>
    %133 = math.tanh %132 : vector<1x32xf32>
    %134 = arith.mulf %129, %133 : vector<1x32xf32>
    %cst_20 = arith.constant dense<0.000000e+00> : vector<1x128xf32>
    %135 = tpu.matmul %134, %2, %cst_20 {dimension_numbers = #tpu.dot_dimension_numbers<[1], [0], [0], [1], [0, 0, 1, 1], [], []>} : vector<1x32xf32>, vector<32x128xf32>, vector<1x128xf32> -> vector<1x128xf32>
    %136 = vector.extract_strided_slice %8 {offsets = [7, 0], sizes = [1, 128], strides = [1, 1]} : vector<8x128xf32> to vector<1x128xf32>
    %137 = arith.addf %135, %136 : vector<1x128xf32>
    %138 = arith.mulf %137, %17 : vector<1x128xf32>
    %139 = math.tanh %138 : vector<1x128xf32>
    %140 = arith.mulf %139, %17 : vector<1x128xf32>
    %141 = arith.addf %140, %20 : vector<1x128xf32>
    %142 = vector.extract_strided_slice %141 {offsets = [0, 0], sizes = [1, 32], strides = [1, 1]} : vector<1x128xf32> to vector<1x32xf32>
    %143 = vector.extract_strided_slice %141 {offsets = [0, 32], sizes = [1, 32], strides = [1, 1]} : vector<1x128xf32> to vector<1x32xf32>
    %144 = vector.extract_strided_slice %141 {offsets = [0, 64], sizes = [1, 32], strides = [1, 1]} : vector<1x128xf32> to vector<1x32xf32>
    %145 = vector.extract_strided_slice %141 {offsets = [0, 96], sizes = [1, 32], strides = [1, 1]} : vector<1x128xf32> to vector<1x32xf32>
    %146 = arith.mulf %143, %132 : vector<1x32xf32>
    %147 = arith.mulf %142, %144 : vector<1x32xf32>
    %148 = arith.addf %146, %147 : vector<1x32xf32>
    %149 = math.tanh %148 : vector<1x32xf32>
    %150 = arith.mulf %145, %149 : vector<1x32xf32>
    %cst_21 = arith.constant dense<0.000000e+00> : vector<1x128xf32>
    %151 = tpu.matmul %150, %4, %cst_21 {dimension_numbers = #tpu.dot_dimension_numbers<[1], [0], [0], [1], [0, 0, 1, 1], [], []>} : vector<1x32xf32>, vector<32x128xf32>, vector<1x128xf32> -> vector<1x128xf32>
    %152 = arith.addf %151, %5 : vector<1x128xf32>
    %153 = vector.extract_strided_slice %152 {offsets = [0, 0], sizes = [1, 4], strides = [1, 1]} : vector<1x128xf32> to vector<1x4xf32>
    %c0_22 = arith.constant 0 : index
    %c0_23 = arith.constant 0 : index
    %154 = vector.load %arg2[%c0_22, %c0_23] : memref<1x4xf32, #tpu.memory_space<vmem>>, vector<1x4xf32>
    tpu.vector_store %arg2[%c0_22, %c0_23], %153 {strides = array<i32>} : memref<1x4xf32, #tpu.memory_space<vmem>>, vector<1x4xf32>,
    return
  }
}

</mosaic_0001>

<llo_original>
// kernel: tpu_custom_call.1
$region0: #{tpu_custom_call.1}
  #allocation0 [shape = 'u32[]', space=smem, size = 0x4, offset = 0x4, fixed_abs, tag = 'smem constant byte address 0x4 - core index']
  #allocation1 [shape = 'u32[144,128]{1,0:T(1,128)}', space=vmem, size = 0x12000, scoped, tag = 'internal scratch']
  %s0 = inlined_call_operand.vmem [shape: f32[8,4], index: 0, kind: input, shape index: {}]
  %s1 = inlined_call_operand.hbm [shape: f32[72,128], index: 1, kind: input, shape index: {}]
  %s2 = inlined_call_operand.hbm [shape: f32[1,4], index: 2, kind: output, shape index: {}]
  %s3 = sld [smem:[#allocation0]]
  $region22: #{tpu_custom_call.1} parent=0
    _
  %s5 = ssub.s32 1, %s3
  %s6 = scalar_select 0, %s5, %s3
  $region1: #{tpu_custom_call.1} parent=0
    #allocation2 [shape = 'u8[36864]{0}', space=vmem, size = 0x9000, scoped, tag = 'input window, operand 1, single buffered']
    #allocation3 [shape = 's32[1]{0}', space=sflag, size = 0x4, scoped, tag = 'scoped memory for tpu_custom_call.1']
    #allocation4 [shape = 's32[1]{0}', space=sflag, size = 0x4, scoped, tag = 'scoped memory for tpu_custom_call.1']
    #allocation5 [shape = 'u8[512]{0}', space=vmem, size = 0x400, scoped, tag = 'output window, operand 0, single buffered']
    %7 = vsyncpa [#allocation3], 0
    %8 = vsyncpa [#allocation4], 0
    // Predicated region
    $region2: #{tpu_custom_call.1} parent=1 // pred_check
      _
    $region3: #{tpu_custom_call.1} parent=1 // pred_check_branch
      %10 = sbr.rel (0) target = $region5
    $region4: #{tpu_custom_call.1} parent=1 // pred_region
      _
    $region5: #{tpu_custom_call.1} parent=1 // pred_fallthru
      _
    // Predicated region
    $region6: #{tpu_custom_call.1} parent=1 // pred_check
      _
    $region7: #{tpu_custom_call.1} parent=1 // pred_check_branch
      %12 = sbr.rel (0) target = $region9
    $region8: #{tpu_custom_call.1} parent=1 // pred_region
      %s14 = ssub.s32 1152, 1152
      %15 = vsyncadd [#allocation3], %s14
      %s16 = sshll.u32 [#allocation2], 4
      %s17 = int_to_ptr.vmem [resolvable:$true] %s16
      %22 = dma.hbm_to_vmem [thread:$0]  %s1, 1152, %s17, [#allocation3], 128, 128, 8
    $region9: #{tpu_custom_call.1} parent=1 // pred_fallthru
      _
    // Predicated region
    $region10: #{tpu_custom_call.1} parent=1 // pred_check
      _
    $region11: #{tpu_custom_call.1} parent=1 // pred_check_branch
      %24 = sbr.rel (0) target = $region13
    $region12: #{tpu_custom_call.1} parent=1 // pred_region
      %25 = dma.done [#allocation3], 1152
    $region13: #{tpu_custom_call.1} parent=1 // pred_fallthru
      _
    %v26 = vld [vmem:[%s0] sm:$0xff]
    %v27 = vld [vmem:[#allocation2] sm:$0xf]
    %v28 = vld [vmem:[#allocation2 + $0x4] sm:$0xff]
    %v29 = vld [vmem:[#allocation2 + $0xc] sm:$0xff]
    %v30 = vld [vmem:[#allocation2 + $0x14] sm:$0xff]
    %v31 = vld [vmem:[#allocation2 + $0x1c] sm:$0xff]
    %v32 = vld [vmem:[#allocation2 + $0x24] sm:$0x1]
    %v33 = vld [vmem:[#allocation2 + $0x25] sm:$0xff]
    %v34 = vld [vmem:[#allocation2 + $0x2d] sm:$0xff]
    %v35 = vld [vmem:[#allocation2 + $0x35] sm:$0xff]
    %v36 = vld [vmem:[#allocation2 + $0x3d] sm:$0xff]
    %v37 = vld [vmem:[#allocation2 + $0x45] sm:$0x1]
    %v38 = vlaneseq
    %v39 = vshrl.u32 %v38, 7
    %v40 = vsub.s32 0, %v39
    %v41 = vrot.slane %v32, %v40
    %vm42 = vcmask 31744
    %v44 = vsel %vm42, %v26, 0
    %vm46 = vcmask 1043456
    %v48 = vsel %vm46, %v27, 0
    %50 = vmatprep.subr.mxu0 0.0
    %51 = vmatpush1.msra.mxu0 %v48
    %52 = vmatprep.subr.mxu0 0.0
    %53 = vmatpush1.msra.mxu0 0.0
    %54 = vmatprep.subr.mxu0 0.0
    %55 = vmatpush1.msra.mxu0 0.0
    %56 = vmatprep.subr.mxu0 0.0
    %57 = vmatpush1.msra.mxu0 0.0
    %58 = vmatprep.subr.mxu0 0.0
    %59 = vmatpush1.msra.mxu0 0.0
    %60 = vmatprep.subr.mxu0 0.0
    %61 = vmatpush1.msra.mxu0 0.0
    %62 = vmatprep.subr.mxu0 0.0
    %63 = vmatpush1.msra.mxu0 0.0
    %64 = vmatprep.subr.mxu0 0.0
    %65 = vmatpush1.msra.mxu0 0.0
    %66 = vmatprep.subr.mxu0 0.0
    %67 = vmatpush1.msra.mxu0 0.0
    %68 = vmatprep.subr.mxu0 0.0
    %69 = vmatpush1.msra.mxu0 0.0
    %70 = vmatprep.subr.mxu0 0.0
    %71 = vmatpush1.msra.mxu0 0.0
    %72 = vmatprep.subr.mxu0 0.0
    %73 = vmatpush1.msra.mxu0 0.0
    %74 = vmatprep.subr.mxu0 0.0
    %75 = vmatpush1.msra.mxu0 0.0
    %76 = vmatprep.subr.mxu0 0.0
    %77 = vmatpush1.msra.mxu0 0.0
    %78 = vmatprep.subr.mxu0 0.0
    %79 = vmatpush1.msra.mxu0 0.0
    %80 = vmatprep.subr.mxu0 0.0
    %81 = vmatpush1.msra.mxu0 0.0
    %82 = vmatprep.subr.mxu0 0.0
    %83 = vmatpush1.msra.mxu0 0.0
    %84 = vmatprep.subr.mxu0 0.0
    %85 = vmatpush1.msra.mxu0 0.0
    %86 = vmatprep.subr.mxu0 0.0
    %87 = vmatpush1.msra.mxu0 0.0
    %88 = vmatprep.subr.mxu0 0.0
    %89 = vmatpush1.msra.mxu0 0.0
    %90 = vmatprep.subr.mxu0 0.0
    %91 = vmatpush1.msra.mxu0 0.0
    %92 = vmatprep.subr.mxu0 0.0
    %93 = vmatpush1.msra.mxu0 0.0
    %94 = vmatprep.subr.mxu0 0.0
    %95 = vmatpush1.msra.mxu0 0.0
    %96 = vmatprep.subr.mxu0 0.0
    %97 = vmatpush1.msra.mxu0 0.0
    %98 = vmatprep.subr.mxu0 0.0
    %99 = vmatpush1.msra.mxu0 0.0
    %100 = vmatprep.subr.mxu0 0.0
    %101 = vmatpush1.msra.mxu0 0.0
    %102 = vmatprep.subr.mxu0 0.0
    %103 = vmatpush1.msra.mxu0 0.0
    %104 = vmatprep.subr.mxu0 0.0
    %105 = vmatpush1.msra.mxu0 0.0
    %106 = vmatprep.subr.mxu0 0.0
    %107 = vmatpush1.msra.mxu0 0.0
    %108 = vmatprep.subr.mxu0 0.0
    %109 = vmatpush1.msra.mxu0 0.0
    %110 = vmatprep.subr.mxu0 0.0
    %111 = vmatpush1.msra.mxu0 0.0
    %112 = vmatprep.subr.mxu0 0.0
    %113 = vmatpush1.msra.mxu0 0.0
    %114 = vmatprep.mubr.f32.mxu0 0.0
    %115 = vmatmul.mubr.f32.gmra.mrb[0].mxu0 %v44
    %v116 = vpop.f32.mrb[0].mxu0
    %v117 = vadd.f32 %v41, %v116
    %v118 = vpop.f32.mrb[0].mxu0
    %119 = vdwg.mxu0
    %v120 = vlaneseq
    %v121 = vand.u32 %v120, 127
    %vm122 = vcmp.ge.s32.totalorder %v121, 64
    %vm123 = vcmp.lt.s32.totalorder %v121, 96
    %vm124 = vmand %vm122, %vm123
    %v125 = vsel %vm124, 1.0, 0.5
    %v126 = vsel %vm124, 0.0, 0.5
    %vm127 = vcmask 261120
    %v129 = vsel %vm127, 0.0, 0
    %131 = vmatprep.subr.mxu0 0.0
    %132 = vmatpush1.msra.mxu0 %v28
    %133 = vmatprep.subr.mxu0 0.0
    %134 = vmatpush1.msra.mxu0 %v29
    %135 = vmatprep.subr.mxu0 0.0
    %136 = vmatpush1.msra.mxu0 %v30
    %137 = vmatprep.subr.mxu0 0.0
    %138 = vmatpush1.msra.mxu0 %v31
    %139 = vmatprep.subr.mxu0 0.0
    %140 = vmatpush1.msra.mxu0 0.0
    %141 = vmatprep.subr.mxu0 0.0
    %142 = vmatpush1.msra.mxu0 0.0
    %143 = vmatprep.subr.mxu0 0.0
    %144 = vmatpush1.msra.mxu0 0.0
    %145 = vmatprep.subr.mxu0 0.0
    %146 = vmatpush1.msra.mxu0 0.0
    %147 = vmatprep.subr.mxu0 0.0
    %148 = vmatpush1.msra.mxu0 0.0
    %149 = vmatprep.subr.mxu0 0.0
    %150 = vmatpush1.msra.mxu0 0.0
    %151 = vmatprep.subr.mxu0 0.0
    %152 = vmatpush1.msra.mxu0 0.0
    %153 = vmatprep.subr.mxu0 0.0
    %154 = vmatpush1.msra.mxu0 0.0
    %155 = vmatprep.subr.mxu0 0.0
    %156 = vmatpush1.msra.mxu0 0.0
    %157 = vmatprep.subr.mxu0 0.0
    %158 = vmatpush1.msra.mxu0 0.0
    %159 = vmatprep.subr.mxu0 0.0
    %160 = vmatpush1.msra.mxu0 0.0
    %161 = vmatprep.subr.mxu0 0.0
    %162 = vmatpush1.msra.mxu0 0.0
    %163 = vmatprep.subr.mxu0 0.0
    %164 = vmatpush1.msra.mxu0 0.0
    %165 = vmatprep.subr.mxu0 0.0
    %166 = vmatpush1.msra.mxu0 0.0
    %167 = vmatprep.subr.mxu0 0.0
    %168 = vmatpush1.msra.mxu0 0.0
    %169 = vmatprep.subr.mxu0 0.0
    %170 = vmatpush1.msra.mxu0 0.0
    %171 = vmatprep.subr.mxu0 0.0
    %172 = vmatpush1.msra.mxu0 0.0
    %173 = vmatprep.subr.mxu0 0.0
    %174 = vmatpush1.msra.mxu0 0.0
    %175 = vmatprep.subr.mxu0 0.0
    %176 = vmatpush1.msra.mxu0 0.0
    %177 = vmatprep.subr.mxu0 0.0
    %178 = vmatpush1.msra.mxu0 0.0
    %179 = vmatprep.subr.mxu0 0.0
    %180 = vmatpush1.msra.mxu0 0.0
    %181 = vmatprep.subr.mxu0 0.0
    %182 = vmatpush1.msra.mxu0 0.0
    %183 = vmatprep.subr.mxu0 0.0
    %184 = vmatpush1.msra.mxu0 0.0
    %185 = vmatprep.subr.mxu0 0.0
    %186 = vmatpush1.msra.mxu0 0.0
    %187 = vmatprep.subr.mxu0 0.0
    %188 = vmatpush1.msra.mxu0 0.0
    %189 = vmatprep.subr.mxu0 0.0
    %190 = vmatpush1.msra.mxu0 0.0
    %191 = vmatprep.subr.mxu0 0.0
    %192 = vmatpush1.msra.mxu0 0.0
    %193 = vmatprep.subr.mxu0 0.0
    %194 = vmatpush1.msra.mxu0 0.0
    %195 = vmatprep.mubr.f32.mxu0 0.0
    %196 = vmatmul.mubr.f32.gmra.mrb[0].mxu0 %v129
    %v197 = vpop.f32.mrb[0].mxu0
    %v198 = vadd.f32 %v117, %v197
    %v199 = vpop.f32.mrb[0].mxu0
    %200 = vdwg.mxu0
    %v201 = vmul.f32 %v198, %v125
    %v202 = vtanh.pop %v201
    %v203 = vmul.f32 %v202, %v125
    %v204 = vadd.f32 %v203, %v126
    %v205 = vmul.f32 %v204, 0.0
    %207 = vrot.lane.b32.xlu0 %v204, 64
    %v208 = vpop.permute.xlu0 %207
    %v210 = vmul.f32 %v204, %v208
    %212 = vrot.lane.b32.xlu0 %v210, 32
    %v213 = vpop.permute.xlu0 %212
    %v215 = vadd.f32 %v205, %v213
    %v216 = vtanh.pop %v215
    %218 = vrot.lane.b32.xlu0 %v216, 64
    %v219 = vpop.permute.xlu0 %218
    %v221 = vmul.f32 %v204, %v219
    %223 = vrot.lane.b32.xlu0 %v221, 32
    %v224 = vpop.permute.xlu0 %223
    %v226 = vrot.slane %v117, 1
    %v228 = vsel %vm127, %v224, 0
    %230 = vmatprep.subr.mxu0 0.0
    %231 = vmatpush1.msra.mxu0 %v28
    %232 = vmatprep.subr.mxu0 0.0
    %233 = vmatpush1.msra.mxu0 %v29
    %234 = vmatprep.subr.mxu0 0.0
    %235 = vmatpush1.msra.mxu0 %v30
    %236 = vmatprep.subr.mxu0 0.0
    %237 = vmatpush1.msra.mxu0 %v31
    %238 = vmatprep.subr.mxu0 0.0
    %239 = vmatpush1.msra.mxu0 0.0
    %240 = vmatprep.subr.mxu0 0.0
    %241 = vmatpush1.msra.mxu0 0.0
    %242 = vmatprep.subr.mxu0 0.0
    %243 = vmatpush1.msra.mxu0 0.0
    %244 = vmatprep.subr.mxu0 0.0
    %245 = vmatpush1.msra.mxu0 0.0
    %246 = vmatprep.subr.mxu0 0.0
    %247 = vmatpush1.msra.mxu0 0.0
    %248 = vmatprep.subr.mxu0 0.0
    %249 = vmatpush1.msra.mxu0 0.0
    %250 = vmatprep.subr.mxu0 0.0
    %251 = vmatpush1.msra.mxu0 0.0
    %252 = vmatprep.subr.mxu0 0.0
    %253 = vmatpush1.msra.mxu0 0.0
    %254 = vmatprep.subr.mxu0 0.0
    %255 = vmatpush1.msra.mxu0 0.0
    %256 = vmatprep.subr.mxu0 0.0
    %257 = vmatpush1.msra.mxu0 0.0
    %258 = vmatprep.subr.mxu0 0.0
    %259 = vmatpush1.msra.mxu0 0.0
    %260 = vmatprep.subr.mxu0 0.0
    %261 = vmatpush1.msra.mxu0 0.0
    %262 = vmatprep.subr.mxu0 0.0
    %263 = vmatpush1.msra.mxu0 0.0
    %264 = vmatprep.subr.mxu0 0.0
    %265 = vmatpush1.msra.mxu0 0.0
    %266 = vmatprep.subr.mxu0 0.0
    %267 = vmatpush1.msra.mxu0 0.0
    %268 = vmatprep.subr.mxu0 0.0
    %269 = vmatpush1.msra.mxu0 0.0
    %270 = vmatprep.subr.mxu0 0.0
    %271 = vmatpush1.msra.mxu0 0.0
    %272 = vmatprep.subr.mxu0 0.0
    %273 = vmatpush1.msra.mxu0 0.0
    %274 = vmatprep.subr.mxu0 0.0
    %275 = vmatpush1.msra.mxu0 0.0
    %276 = vmatprep.subr.mxu0 0.0
    %277 = vmatpush1.msra.mxu0 0.0
    %278 = vmatprep.subr.mxu0 0.0
    %279 = vmatpush1.msra.mxu0 0.0
    %280 = vmatprep.subr.mxu0 0.0
    %281 = vmatpush1.msra.mxu0 0.0
    %282 = vmatprep.subr.mxu0 0.0
    %283 = vmatpush1.msra.mxu0 0.0
    %284 = vmatprep.subr.mxu0 0.0
    %285 = vmatpush1.msra.mxu0 0.0
    %286 = vmatprep.subr.mxu0 0.0
    %287 = vmatpush1.msra.mxu0 0.0
    %288 = vmatprep.subr.mxu0 0.0
    %289 = vmatpush1.msra.mxu0 0.0
    %290 = vmatprep.subr.mxu0 0.0
    %291 = vmatpush1.msra.mxu0 0.0
    %292 = vmatprep.subr.mxu0 0.0
    %293 = vmatpush1.msra.mxu0 0.0
    %294 = vmatprep.mubr.f32.mxu0 0.0
    %295 = vmatmul.mubr.f32.gmra.mrb[0].mxu0 %v228
    %v296 = vpop.f32.mrb[0].mxu0
    %v297 = vadd.f32 %v226, %v296
    %v298 = vpop.f32.mrb[0].mxu0
    %299 = vdwg.mxu0
    %v300 = vmul.f32 %v297, %v125
    %v301 = vtanh.pop %v300
    %v302 = vmul.f32 %v301, %v125
    %v303 = vadd.f32 %v302, %v126
    %v304 = vmul.f32 %v303, %v215
    %306 = vrot.lane.b32.xlu0 %v303, 64
    %v307 = vpop.permute.xlu0 %306
    %v309 = vmul.f32 %v303, %v307
    %311 = vrot.lane.b32.xlu0 %v309, 32
    %v312 = vpop.permute.xlu0 %311
    %v314 = vadd.f32 %v304, %v312
    %v315 = vtanh.pop %v314
    %317 = vrot.lane.b32.xlu0 %v315, 64
    %v318 = vpop.permute.xlu0 %317
    %v320 = vmul.f32 %v303, %v318
    %322 = vrot.lane.b32.xlu0 %v320, 32
    %v323 = vpop.permute.xlu0 %322
    %v324 = vrot.slane %v117, 2
    %v326 = vsel %vm127, %v323, 0
    %328 = vmatprep.subr.mxu0 0.0
    %329 = vmatpush1.msra.mxu0 %v28
    %330 = vmatprep.subr.mxu0 0.0
    %331 = vmatpush1.msra.mxu0 %v29
    %332 = vmatprep.subr.mxu0 0.0
    %333 = vmatpush1.msra.mxu0 %v30
    %334 = vmatprep.subr.mxu0 0.0
    %335 = vmatpush1.msra.mxu0 %v31
    %336 = vmatprep.subr.mxu0 0.0
    %337 = vmatpush1.msra.mxu0 0.0
    %338 = vmatprep.subr.mxu0 0.0
    %339 = vmatpush1.msra.mxu0 0.0
    %340 = vmatprep.subr.mxu0 0.0
    %341 = vmatpush1.msra.mxu0 0.0
    %342 = vmatprep.subr.mxu0 0.0
    %343 = vmatpush1.msra.mxu0 0.0
    %344 = vmatprep.subr.mxu0 0.0
    %345 = vmatpush1.msra.mxu0 0.0
    %346 = vmatprep.subr.mxu0 0.0
    %347 = vmatpush1.msra.mxu0 0.0
    %348 = vmatprep.subr.mxu0 0.0
    %349 = vmatpush1.msra.mxu0 0.0
    %350 = vmatprep.subr.mxu0 0.0
    %351 = vmatpush1.msra.mxu0 0.0
    %352 = vmatprep.subr.mxu0 0.0
    %353 = vmatpush1.msra.mxu0 0.0
    %354 = vmatprep.subr.mxu0 0.0
    %355 = vmatpush1.msra.mxu0 0.0
    %356 = vmatprep.subr.mxu0 0.0
    %357 = vmatpush1.msra.mxu0 0.0
    %358 = vmatprep.subr.mxu0 0.0
    %359 = vmatpush1.msra.mxu0 0.0
    %360 = vmatprep.subr.mxu0 0.0
    %361 = vmatpush1.msra.mxu0 0.0
    %362 = vmatprep.subr.mxu0 0.0
    %363 = vmatpush1.msra.mxu0 0.0
    %364 = vmatprep.subr.mxu0 0.0
    %365 = vmatpush1.msra.mxu0 0.0
    %366 = vmatprep.subr.mxu0 0.0
    %367 = vmatpush1.msra.mxu0 0.0
    %368 = vmatprep.subr.mxu0 0.0
    %369 = vmatpush1.msra.mxu0 0.0
    %370 = vmatprep.subr.mxu0 0.0
    %371 = vmatpush1.msra.mxu0 0.0
    %372 = vmatprep.subr.mxu0 0.0
    %373 = vmatpush1.msra.mxu0 0.0
    %374 = vmatprep.subr.mxu0 0.0
    %375 = vmatpush1.msra.mxu0 0.0
    %376 = vmatprep.subr.mxu0 0.0
    %377 = vmatpush1.msra.mxu0 0.0
    %378 = vmatprep.subr.mxu0 0.0
    %379 = vmatpush1.msra.mxu0 0.0
    %380 = vmatprep.subr.mxu0 0.0
    %381 = vmatpush1.msra.mxu0 0.0
    %382 = vmatprep.subr.mxu0 0.0
    %383 = vmatpush1.msra.mxu0 0.0
    %384 = vmatprep.subr.mxu0 0.0
    %385 = vmatpush1.msra.mxu0 0.0
    %386 = vmatprep.subr.mxu0 0.0
    %387 = vmatpush1.msra.mxu0 0.0
    %388 = vmatprep.subr.mxu0 0.0
    %389 = vmatpush1.msra.mxu0 0.0
    %390 = vmatprep.subr.mxu0 0.0
    %391 = vmatpush1.msra.mxu0 0.0
    %392 = vmatprep.mubr.f32.mxu0 0.0
    %393 = vmatmul.mubr.f32.gmra.mrb[0].mxu0 %v326
    %v394 = vpop.f32.mrb[0].mxu0
    %v395 = vadd.f32 %v324, %v394
    %v396 = vpop.f32.mrb[0].mxu0
    %397 = vdwg.mxu0
    %v398 = vmul.f32 %v395, %v125
    %v399 = vtanh.pop %v398
    %v400 = vmul.f32 %v399, %v125
    %v401 = vadd.f32 %v400, %v126
    %v402 = vmul.f32 %v401, %v314
    %404 = vrot.lane.b32.xlu0 %v401, 64
    %v405 = vpop.permute.xlu0 %404
    %v407 = vmul.f32 %v401, %v405
    %409 = vrot.lane.b32.xlu0 %v407, 32
    %v410 = vpop.permute.xlu0 %409
    %v412 = vadd.f32 %v402, %v410
    %v413 = vtanh.pop %v412
    %415 = vrot.lane.b32.xlu0 %v413, 64
    %v416 = vpop.permute.xlu0 %415
    %v418 = vmul.f32 %v401, %v416
    %420 = vrot.lane.b32.xlu0 %v418, 32
    %v421 = vpop.permute.xlu0 %420
    %v422 = vrot.slane %v117, 3
    %v424 = vsel %vm127, %v421, 0
    %426 = vmatprep.subr.mxu0 0.0
    %427 = vmatpush1.msra.mxu0 %v28
    %428 = vmatprep.subr.mxu0 0.0
    %429 = vmatpush1.msra.mxu0 %v29
    %430 = vmatprep.subr.mxu0 0.0
    %431 = vmatpush1.msra.mxu0 %v30
    %432 = vmatprep.subr.mxu0 0.0
    %433 = vmatpush1.msra.mxu0 %v31
    %434 = vmatprep.subr.mxu0 0.0
    %435 = vmatpush1.msra.mxu0 0.0
    %436 = vmatprep.subr.mxu0 0.0
    %437 = vmatpush1.msra.mxu0 0.0
    %438 = vmatprep.subr.mxu0 0.0
    %439 = vmatpush1.msra.mxu0 0.0
    %440 = vmatprep.subr.mxu0 0.0
    %441 = vmatpush1.msra.mxu0 0.0
    %442 = vmatprep.subr.mxu0 0.0
    %443 = vmatpush1.msra.mxu0 0.0
    %444 = vmatprep.subr.mxu0 0.0
    %445 = vmatpush1.msra.mxu0 0.0
    %446 = vmatprep.subr.mxu0 0.0
    %447 = vmatpush1.msra.mxu0 0.0
    %448 = vmatprep.subr.mxu0 0.0
    %449 = vmatpush1.msra.mxu0 0.0
    %450 = vmatprep.subr.mxu0 0.0
    %451 = vmatpush1.msra.mxu0 0.0
    %452 = vmatprep.subr.mxu0 0.0
    %453 = vmatpush1.msra.mxu0 0.0
    %454 = vmatprep.subr.mxu0 0.0
    %455 = vmatpush1.msra.mxu0 0.0
    %456 = vmatprep.subr.mxu0 0.0
    %457 = vmatpush1.msra.mxu0 0.0
    %458 = vmatprep.subr.mxu0 0.0
    %459 = vmatpush1.msra.mxu0 0.0
    %460 = vmatprep.subr.mxu0 0.0
    %461 = vmatpush1.msra.mxu0 0.0
    %462 = vmatprep.subr.mxu0 0.0
    %463 = vmatpush1.msra.mxu0 0.0
    %464 = vmatprep.subr.mxu0 0.0
    %465 = vmatpush1.msra.mxu0 0.0
    %466 = vmatprep.subr.mxu0 0.0
    %467 = vmatpush1.msra.mxu0 0.0
    %468 = vmatprep.subr.mxu0 0.0
    %469 = vmatpush1.msra.mxu0 0.0
    %470 = vmatprep.subr.mxu0 0.0
    %471 = vmatpush1.msra.mxu0 0.0
    %472 = vmatprep.subr.mxu0 0.0
    %473 = vmatpush1.msra.mxu0 0.0
    %474 = vmatprep.subr.mxu0 0.0
    %475 = vmatpush1.msra.mxu0 0.0
    %476 = vmatprep.subr.mxu0 0.0
    %477 = vmatpush1.msra.mxu0 0.0
    %478 = vmatprep.subr.mxu0 0.0
    %479 = vmatpush1.msra.mxu0 0.0
    %480 = vmatprep.subr.mxu0 0.0
    %481 = vmatpush1.msra.mxu0 0.0
    %482 = vmatprep.subr.mxu0 0.0
    %483 = vmatpush1.msra.mxu0 0.0
    %484 = vmatprep.subr.mxu0 0.0
    %485 = vmatpush1.msra.mxu0 0.0
    %486 = vmatprep.subr.mxu0 0.0
    %487 = vmatpush1.msra.mxu0 0.0
    %488 = vmatprep.subr.mxu0 0.0
    %489 = vmatpush1.msra.mxu0 0.0
    %490 = vmatprep.mubr.f32.mxu0 0.0
    %491 = vmatmul.mubr.f32.gmra.mrb[0].mxu0 %v424
    %v492 = vpop.f32.mrb[0].mxu0
    %v493 = vadd.f32 %v422, %v492
    %v494 = vpop.f32.mrb[0].mxu0
    %495 = vdwg.mxu0
    %v496 = vmul.f32 %v493, %v125
    %v497 = vtanh.pop %v496
    %v498 = vmul.f32 %v497, %v125
    %v499 = vadd.f32 %v498, %v126
    %v500 = vmul.f32 %v499, %v412
    %502 = vrot.lane.b32.xlu0 %v499, 64
    %v503 = vpop.permute.xlu0 %502
    %v505 = vmul.f32 %v499, %v503
    %507 = vrot.lane.b32.xlu0 %v505, 32
    %v508 = vpop.permute.xlu0 %507
    %v510 = vadd.f32 %v500, %v508
    %v511 = vtanh.pop %v510
    %513 = vrot.lane.b32.xlu0 %v511, 64
    %v514 = vpop.permute.xlu0 %513
    %v516 = vmul.f32 %v499, %v514
    %518 = vrot.lane.b32.xlu0 %v516, 32
    %v519 = vpop.permute.xlu0 %518
    %v520 = vrot.slane %v117, 4
    %v522 = vsel %vm127, %v519, 0
    %524 = vmatprep.subr.mxu0 0.0
    %525 = vmatpush1.msra.mxu0 %v28
    %526 = vmatprep.subr.mxu0 0.0
    %527 = vmatpush1.msra.mxu0 %v29
    %528 = vmatprep.subr.mxu0 0.0
    %529 = vmatpush1.msra.mxu0 %v30
    %530 = vmatprep.subr.mxu0 0.0
    %531 = vmatpush1.msra.mxu0 %v31
    %532 = vmatprep.subr.mxu0 0.0
    %533 = vmatpush1.msra.mxu0 0.0
    %534 = vmatprep.subr.mxu0 0.0
    %535 = vmatpush1.msra.mxu0 0.0
    %536 = vmatprep.subr.mxu0 0.0
    %537 = vmatpush1.msra.mxu0 0.0
    %538 = vmatprep.subr.mxu0 0.0
    %539 = vmatpush1.msra.mxu0 0.0
    %540 = vmatprep.subr.mxu0 0.0
    %541 = vmatpush1.msra.mxu0 0.0
    %542 = vmatprep.subr.mxu0 0.0
    %543 = vmatpush1.msra.mxu0 0.0
    %544 = vmatprep.subr.mxu0 0.0
    %545 = vmatpush1.msra.mxu0 0.0
    %546 = vmatprep.subr.mxu0 0.0
    %547 = vmatpush1.msra.mxu0 0.0
    %548 = vmatprep.subr.mxu0 0.0
    %549 = vmatpush1.msra.mxu0 0.0
    %550 = vmatprep.subr.mxu0 0.0
    %551 = vmatpush1.msra.mxu0 0.0
    %552 = vmatprep.subr.mxu0 0.0
    %553 = vmatpush1.msra.mxu0 0.0
    %554 = vmatprep.subr.mxu0 0.0
    %555 = vmatpush1.msra.mxu0 0.0
    %556 = vmatprep.subr.mxu0 0.0
    %557 = vmatpush1.msra.mxu0 0.0
    %558 = vmatprep.subr.mxu0 0.0
    %559 = vmatpush1.msra.mxu0 0.0
    %560 = vmatprep.subr.mxu0 0.0
    %561 = vmatpush1.msra.mxu0 0.0
    %562 = vmatprep.subr.mxu0 0.0
    %563 = vmatpush1.msra.mxu0 0.0
    %564 = vmatprep.subr.mxu0 0.0
    %565 = vmatpush1.msra.mxu0 0.0
    %566 = vmatprep.subr.mxu0 0.0
    %567 = vmatpush1.msra.mxu0 0.0
    %568 = vmatprep.subr.mxu0 0.0
    %569 = vmatpush1.msra.mxu0 0.0
    %570 = vmatprep.subr.mxu0 0.0
    %571 = vmatpush1.msra.mxu0 0.0
    %572 = vmatprep.subr.mxu0 0.0
    %573 = vmatpush1.msra.mxu0 0.0
    %574 = vmatprep.subr.mxu0 0.0
    %575 = vmatpush1.msra.mxu0 0.0
    %576 = vmatprep.subr.mxu0 0.0
    %577 = vmatpush1.msra.mxu0 0.0
    %578 = vmatprep.subr.mxu0 0.0
    %579 = vmatpush1.msra.mxu0 0.0
    %580 = vmatprep.subr.mxu0 0.0
    %581 = vmatpush1.msra.mxu0 0.0
    %582 = vmatprep.subr.mxu0 0.0
    %583 = vmatpush1.msra.mxu0 0.0
    %584 = vmatprep.subr.mxu0 0.0
    %585 = vmatpush1.msra.mxu0 0.0
    %586 = vmatprep.subr.mxu0 0.0
    %587 = vmatpush1.msra.mxu0 0.0
    %588 = vmatprep.mubr.f32.mxu0 0.0
    %589 = vmatmul.mubr.f32.gmra.mrb[0].mxu0 %v522
    %v590 = vpop.f32.mrb[0].mxu0
    %v591 = vadd.f32 %v520, %v590
    %v592 = vpop.f32.mrb[0].mxu0
    %593 = vdwg.mxu0
    %v594 = vmul.f32 %v591, %v125
    %v595 = vtanh.pop %v594
    %v596 = vmul.f32 %v595, %v125
    %v597 = vadd.f32 %v596, %v126
    %v598 = vmul.f32 %v597, %v510
    %600 = vrot.lane.b32.xlu0 %v597, 64
    %v601 = vpop.permute.xlu0 %600
    %v603 = vmul.f32 %v597, %v601
    %605 = vrot.lane.b32.xlu0 %v603, 32
    %v606 = vpop.permute.xlu0 %605
    %v608 = vadd.f32 %v598, %v606
    %v609 = vtanh.pop %v608
    %611 = vrot.lane.b32.xlu0 %v609, 64
    %v612 = vpop.permute.xlu0 %611
    %v614 = vmul.f32 %v597, %v612
    %616 = vrot.lane.b32.xlu0 %v614, 32
    %v617 = vpop.permute.xlu0 %616
    %v618 = vrot.slane %v117, 5
    %v620 = vsel %vm127, %v617, 0
    %622 = vmatprep.subr.mxu0 0.0
    %623 = vmatpush1.msra.mxu0 %v28
    %624 = vmatprep.subr.mxu0 0.0
    %625 = vmatpush1.msra.mxu0 %v29
    %626 = vmatprep.subr.mxu0 0.0
    %627 = vmatpush1.msra.mxu0 %v30
    %628 = vmatprep.subr.mxu0 0.0
    %629 = vmatpush1.msra.mxu0 %v31
    %630 = vmatprep.subr.mxu0 0.0
    %631 = vmatpush1.msra.mxu0 0.0
    %632 = vmatprep.subr.mxu0 0.0
    %633 = vmatpush1.msra.mxu0 0.0
    %634 = vmatprep.subr.mxu0 0.0
    %635 = vmatpush1.msra.mxu0 0.0
    %636 = vmatprep.subr.mxu0 0.0
    %637 = vmatpush1.msra.mxu0 0.0
    %638 = vmatprep.subr.mxu0 0.0
    %639 = vmatpush1.msra.mxu0 0.0
    %640 = vmatprep.subr.mxu0 0.0
    %641 = vmatpush1.msra.mxu0 0.0
    %642 = vmatprep.subr.mxu0 0.0
    %643 = vmatpush1.msra.mxu0 0.0
    %644 = vmatprep.subr.mxu0 0.0
    %645 = vmatpush1.msra.mxu0 0.0
    %646 = vmatprep.subr.mxu0 0.0
    %647 = vmatpush1.msra.mxu0 0.0
    %648 = vmatprep.subr.mxu0 0.0
    %649 = vmatpush1.msra.mxu0 0.0
    %650 = vmatprep.subr.mxu0 0.0
    %651 = vmatpush1.msra.mxu0 0.0
    %652 = vmatprep.subr.mxu0 0.0
    %653 = vmatpush1.msra.mxu0 0.0
    %654 = vmatprep.subr.mxu0 0.0
    %655 = vmatpush1.msra.mxu0 0.0
    %656 = vmatprep.subr.mxu0 0.0
    %657 = vmatpush1.msra.mxu0 0.0
    %658 = vmatprep.subr.mxu0 0.0
    %659 = vmatpush1.msra.mxu0 0.0
    %660 = vmatprep.subr.mxu0 0.0
    %661 = vmatpush1.msra.mxu0 0.0
    %662 = vmatprep.subr.mxu0 0.0
    %663 = vmatpush1.msra.mxu0 0.0
    %664 = vmatprep.subr.mxu0 0.0
    %665 = vmatpush1.msra.mxu0 0.0
    %666 = vmatprep.subr.mxu0 0.0
    %667 = vmatpush1.msra.mxu0 0.0
    %668 = vmatprep.subr.mxu0 0.0
    %669 = vmatpush1.msra.mxu0 0.0
    %670 = vmatprep.subr.mxu0 0.0
    %671 = vmatpush1.msra.mxu0 0.0
    %672 = vmatprep.subr.mxu0 0.0
    %673 = vmatpush1.msra.mxu0 0.0
    %674 = vmatprep.subr.mxu0 0.0
    %675 = vmatpush1.msra.mxu0 0.0
    %676 = vmatprep.subr.mxu0 0.0
    %677 = vmatpush1.msra.mxu0 0.0
    %678 = vmatprep.subr.mxu0 0.0
    %679 = vmatpush1.msra.mxu0 0.0
    %680 = vmatprep.subr.mxu0 0.0
    %681 = vmatpush1.msra.mxu0 0.0
    %682 = vmatprep.subr.mxu0 0.0
    %683 = vmatpush1.msra.mxu0 0.0
    %684 = vmatprep.subr.mxu0 0.0
    %685 = vmatpush1.msra.mxu0 0.0
    %686 = vmatprep.mubr.f32.mxu0 0.0
    %687 = vmatmul.mubr.f32.gmra.mrb[0].mxu0 %v620
    %v688 = vpop.f32.mrb[0].mxu0
    %v689 = vadd.f32 %v618, %v688
    %v690 = vpop.f32.mrb[0].mxu0
    %691 = vdwg.mxu0
    %v692 = vmul.f32 %v689, %v125
    %v693 = vtanh.pop %v692
    %v694 = vmul.f32 %v693, %v125
    %v695 = vadd.f32 %v694, %v126
    %v696 = vmul.f32 %v695, %v608
    %698 = vrot.lane.b32.xlu0 %v695, 64
    %v699 = vpop.permute.xlu0 %698
    %v701 = vmul.f32 %v695, %v699
    %703 = vrot.lane.b32.xlu0 %v701, 32
    %v704 = vpop.permute.xlu0 %703
    %v706 = vadd.f32 %v696, %v704
    %v707 = vtanh.pop %v706
    %709 = vrot.lane.b32.xlu0 %v707, 64
    %v710 = vpop.permute.xlu0 %709
    %v712 = vmul.f32 %v695, %v710
    %714 = vrot.lane.b32.xlu0 %v712, 32
    %v715 = vpop.permute.xlu0 %714
    %v716 = vrot.slane %v117, 6
    %v718 = vsel %vm127, %v715, 0
    %720 = vmatprep.subr.mxu0 0.0
    %721 = vmatpush1.msra.mxu0 %v28
    %722 = vmatprep.subr.mxu0 0.0
    %723 = vmatpush1.msra.mxu0 %v29
    %724 = vmatprep.subr.mxu0 0.0
    %725 = vmatpush1.msra.mxu0 %v30
    %726 = vmatprep.subr.mxu0 0.0
    %727 = vmatpush1.msra.mxu0 %v31
    %728 = vmatprep.subr.mxu0 0.0
    %729 = vmatpush1.msra.mxu0 0.0
    %730 = vmatprep.subr.mxu0 0.0
    %731 = vmatpush1.msra.mxu0 0.0
    %732 = vmatprep.subr.mxu0 0.0
    %733 = vmatpush1.msra.mxu0 0.0
    %734 = vmatprep.subr.mxu0 0.0
    %735 = vmatpush1.msra.mxu0 0.0
    %736 = vmatprep.subr.mxu0 0.0
    %737 = vmatpush1.msra.mxu0 0.0
    %738 = vmatprep.subr.mxu0 0.0
    %739 = vmatpush1.msra.mxu0 0.0
    %740 = vmatprep.subr.mxu0 0.0
    %741 = vmatpush1.msra.mxu0 0.0
    %742 = vmatprep.subr.mxu0 0.0
    %743 = vmatpush1.msra.mxu0 0.0
    %744 = vmatprep.subr.mxu0 0.0
    %745 = vmatpush1.msra.mxu0 0.0
    %746 = vmatprep.subr.mxu0 0.0
    %747 = vmatpush1.msra.mxu0 0.0
    %748 = vmatprep.subr.mxu0 0.0
    %749 = vmatpush1.msra.mxu0 0.0
    %750 = vmatprep.subr.mxu0 0.0
    %751 = vmatpush1.msra.mxu0 0.0
    %752 = vmatprep.subr.mxu0 0.0
    %753 = vmatpush1.msra.mxu0 0.0
    %754 = vmatprep.subr.mxu0 0.0
    %755 = vmatpush1.msra.mxu0 0.0
    %756 = vmatprep.subr.mxu0 0.0
    %757 = vmatpush1.msra.mxu0 0.0
    %758 = vmatprep.subr.mxu0 0.0
    %759 = vmatpush1.msra.mxu0 0.0
    %760 = vmatprep.subr.mxu0 0.0
    %761 = vmatpush1.msra.mxu0 0.0
    %762 = vmatprep.subr.mxu0 0.0
    %763 = vmatpush1.msra.mxu0 0.0
    %764 = vmatprep.subr.mxu0 0.0
    %765 = vmatpush1.msra.mxu0 0.0
    %766 = vmatprep.subr.mxu0 0.0
    %767 = vmatpush1.msra.mxu0 0.0
    %768 = vmatprep.subr.mxu0 0.0
    %769 = vmatpush1.msra.mxu0 0.0
    %770 = vmatprep.subr.mxu0 0.0
    %771 = vmatpush1.msra.mxu0 0.0
    %772 = vmatprep.subr.mxu0 0.0
    %773 = vmatpush1.msra.mxu0 0.0
    %774 = vmatprep.subr.mxu0 0.0
    %775 = vmatpush1.msra.mxu0 0.0
    %776 = vmatprep.subr.mxu0 0.0
    %777 = vmatpush1.msra.mxu0 0.0
    %778 = vmatprep.subr.mxu0 0.0
    %779 = vmatpush1.msra.mxu0 0.0
    %780 = vmatprep.subr.mxu0 0.0
    %781 = vmatpush1.msra.mxu0 0.0
    %782 = vmatprep.subr.mxu0 0.0
    %783 = vmatpush1.msra.mxu0 0.0
    %784 = vmatprep.mubr.f32.mxu0 0.0
    %785 = vmatmul.mubr.f32.gmra.mrb[0].mxu0 %v718
    %v786 = vpop.f32.mrb[0].mxu0
    %v787 = vadd.f32 %v716, %v786
    %v788 = vpop.f32.mrb[0].mxu0
    %789 = vdwg.mxu0
    %v790 = vmul.f32 %v787, %v125
    %v791 = vtanh.pop %v790
    %v792 = vmul.f32 %v791, %v125
    %v793 = vadd.f32 %v792, %v126
    %v794 = vmul.f32 %v793, %v706
    %796 = vrot.lane.b32.xlu0 %v793, 64
    %v797 = vpop.permute.xlu0 %796
    %v799 = vmul.f32 %v793, %v797
    %801 = vrot.lane.b32.xlu0 %v799, 32
    %v802 = vpop.permute.xlu0 %801
    %v804 = vadd.f32 %v794, %v802
    %v805 = vtanh.pop %v804
    %807 = vrot.lane.b32.xlu0 %v805, 64
    %v808 = vpop.permute.xlu0 %807
    %v810 = vmul.f32 %v793, %v808
    %812 = vrot.lane.b32.xlu0 %v810, 32
    %v813 = vpop.permute.xlu0 %812
    %v814 = vrot.slane %v117, 7
    %v816 = vsel %vm127, %v813, 0
    %818 = vmatprep.subr.mxu0 0.0
    %819 = vmatpush1.msra.mxu0 %v28
    %820 = vmatprep.subr.mxu0 0.0
    %821 = vmatpush1.msra.mxu0 %v29
    %822 = vmatprep.subr.mxu0 0.0
    %823 = vmatpush1.msra.mxu0 %v30
    %824 = vmatprep.subr.mxu0 0.0
    %825 = vmatpush1.msra.mxu0 %v31
    %826 = vmatprep.subr.mxu0 0.0
    %827 = vmatpush1.msra.mxu0 0.0
    %828 = vmatprep.subr.mxu0 0.0
    %829 = vmatpush1.msra.mxu0 0.0
    %830 = vmatprep.subr.mxu0 0.0
    %831 = vmatpush1.msra.mxu0 0.0
    %832 = vmatprep.subr.mxu0 0.0
    %833 = vmatpush1.msra.mxu0 0.0
    %834 = vmatprep.subr.mxu0 0.0
    %835 = vmatpush1.msra.mxu0 0.0
    %836 = vmatprep.subr.mxu0 0.0
    %837 = vmatpush1.msra.mxu0 0.0
    %838 = vmatprep.subr.mxu0 0.0
    %839 = vmatpush1.msra.mxu0 0.0
    %840 = vmatprep.subr.mxu0 0.0
    %841 = vmatpush1.msra.mxu0 0.0
    %842 = vmatprep.subr.mxu0 0.0
    %843 = vmatpush1.msra.mxu0 0.0
    %844 = vmatprep.subr.mxu0 0.0
    %845 = vmatpush1.msra.mxu0 0.0
    %846 = vmatprep.subr.mxu0 0.0
    %847 = vmatpush1.msra.mxu0 0.0
    %848 = vmatprep.subr.mxu0 0.0
    %849 = vmatpush1.msra.mxu0 0.0
    %850 = vmatprep.subr.mxu0 0.0
    %851 = vmatpush1.msra.mxu0 0.0
    %852 = vmatprep.subr.mxu0 0.0
    %853 = vmatpush1.msra.mxu0 0.0
    %854 = vmatprep.subr.mxu0 0.0
    %855 = vmatpush1.msra.mxu0 0.0
    %856 = vmatprep.subr.mxu0 0.0
    %857 = vmatpush1.msra.mxu0 0.0
    %858 = vmatprep.subr.mxu0 0.0
    %859 = vmatpush1.msra.mxu0 0.0
    %860 = vmatprep.subr.mxu0 0.0
    %861 = vmatpush1.msra.mxu0 0.0
    %862 = vmatprep.subr.mxu0 0.0
    %863 = vmatpush1.msra.mxu0 0.0
    %864 = vmatprep.subr.mxu0 0.0
    %865 = vmatpush1.msra.mxu0 0.0
    %866 = vmatprep.subr.mxu0 0.0
    %867 = vmatpush1.msra.mxu0 0.0
    %868 = vmatprep.subr.mxu0 0.0
    %869 = vmatpush1.msra.mxu0 0.0
    %870 = vmatprep.subr.mxu0 0.0
    %871 = vmatpush1.msra.mxu0 0.0
    %872 = vmatprep.subr.mxu0 0.0
    %873 = vmatpush1.msra.mxu0 0.0
    %874 = vmatprep.subr.mxu0 0.0
    %875 = vmatpush1.msra.mxu0 0.0
    %876 = vmatprep.subr.mxu0 0.0
    %877 = vmatpush1.msra.mxu0 0.0
    %878 = vmatprep.subr.mxu0 0.0
    %879 = vmatpush1.msra.mxu0 0.0
    %880 = vmatprep.subr.mxu0 0.0
    %881 = vmatpush1.msra.mxu0 0.0
    %882 = vmatprep.mubr.f32.mxu0 0.0
    %883 = vmatmul.mubr.f32.gmra.mrb[0].mxu0 %v816
    %v884 = vpop.f32.mrb[0].mxu0
    %v885 = vadd.f32 %v814, %v884
    %v886 = vpop.f32.mrb[0].mxu0
    %887 = vdwg.mxu0
    %v888 = vmul.f32 %v885, %v125
    %v889 = vtanh.pop %v888
    %v890 = vmul.f32 %v889, %v125
    %v891 = vadd.f32 %v890, %v126
    %v892 = vmul.f32 %v891, %v804
    %894 = vrot.lane.b32.xlu0 %v891, 64
    %v895 = vpop.permute.xlu0 %894
    %v897 = vmul.f32 %v891, %v895
    %899 = vrot.lane.b32.xlu0 %v897, 32
    %v900 = vpop.permute.xlu0 %899
    %v902 = vadd.f32 %v892, %v900
    %v903 = vtanh.pop %v902
    %905 = vrot.lane.b32.xlu0 %v903, 64
    %v906 = vpop.permute.xlu0 %905
    %v908 = vmul.f32 %v891, %v906
    %910 = vrot.lane.b32.xlu0 %v908, 32
    %v911 = vpop.permute.xlu0 %910
    %v912 = vsel %vm127, %v911, 0
    %914 = vmatprep.subr.mxu0 0.0
    %915 = vmatpush1.msra.mxu0 %v33
    %916 = vmatprep.subr.mxu0 0.0
    %917 = vmatpush1.msra.mxu0 %v34
    %918 = vmatprep.subr.mxu0 0.0
    %919 = vmatpush1.msra.mxu0 %v35
    %920 = vmatprep.subr.mxu0 0.0
    %921 = vmatpush1.msra.mxu0 %v36
    %922 = vmatprep.subr.mxu0 0.0
    %923 = vmatpush1.msra.mxu0 0.0
    %924 = vmatprep.subr.mxu0 0.0
    %925 = vmatpush1.msra.mxu0 0.0
    %926 = vmatprep.subr.mxu0 0.0
    %927 = vmatpush1.msra.mxu0 0.0
    %928 = vmatprep.subr.mxu0 0.0
    %929 = vmatpush1.msra.mxu0 0.0
    %930 = vmatprep.subr.mxu0 0.0
    %931 = vmatpush1.msra.mxu0 0.0
    %932 = vmatprep.subr.mxu0 0.0
    %933 = vmatpush1.msra.mxu0 0.0
    %934 = vmatprep.subr.mxu0 0.0
    %935 = vmatpush1.msra.mxu0 0.0
    %936 = vmatprep.subr.mxu0 0.0
    %937 = vmatpush1.msra.mxu0 0.0
    %938 = vmatprep.subr.mxu0 0.0
    %939 = vmatpush1.msra.mxu0 0.0
    %940 = vmatprep.subr.mxu0 0.0
    %941 = vmatpush1.msra.mxu0 0.0
    %942 = vmatprep.subr.mxu0 0.0
    %943 = vmatpush1.msra.mxu0 0.0
    %944 = vmatprep.subr.mxu0 0.0
    %945 = vmatpush1.msra.mxu0 0.0
    %946 = vmatprep.subr.mxu0 0.0
    %947 = vmatpush1.msra.mxu0 0.0
    %948 = vmatprep.subr.mxu0 0.0
    %949 = vmatpush1.msra.mxu0 0.0
    %950 = vmatprep.subr.mxu0 0.0
    %951 = vmatpush1.msra.mxu0 0.0
    %952 = vmatprep.subr.mxu0 0.0
    %953 = vmatpush1.msra.mxu0 0.0
    %954 = vmatprep.subr.mxu0 0.0
    %955 = vmatpush1.msra.mxu0 0.0
    %956 = vmatprep.subr.mxu0 0.0
    %957 = vmatpush1.msra.mxu0 0.0
    %958 = vmatprep.subr.mxu0 0.0
    %959 = vmatpush1.msra.mxu0 0.0
    %960 = vmatprep.subr.mxu0 0.0
    %961 = vmatpush1.msra.mxu0 0.0
    %962 = vmatprep.subr.mxu0 0.0
    %963 = vmatpush1.msra.mxu0 0.0
    %964 = vmatprep.subr.mxu0 0.0
    %965 = vmatpush1.msra.mxu0 0.0
    %966 = vmatprep.subr.mxu0 0.0
    %967 = vmatpush1.msra.mxu0 0.0
    %968 = vmatprep.subr.mxu0 0.0
    %969 = vmatpush1.msra.mxu0 0.0
    %970 = vmatprep.subr.mxu0 0.0
    %971 = vmatpush1.msra.mxu0 0.0
    %972 = vmatprep.subr.mxu0 0.0
    %973 = vmatpush1.msra.mxu0 0.0
    %974 = vmatprep.subr.mxu0 0.0
    %975 = vmatpush1.msra.mxu0 0.0
    %976 = vmatprep.subr.mxu0 0.0
    %977 = vmatpush1.msra.mxu0 0.0
    %978 = vmatprep.mubr.f32.mxu0 0.0
    %979 = vmatmul.mubr.f32.gmra.mrb[0].mxu0 %v912
    %v980 = vpop.f32.mrb[0].mxu0
    %v981 = vadd.f32 %v37, %v980
    %v982 = vpop.f32.mrb[0].mxu0
    %983 = vdwg.mxu0
    %vm984 = vcmask 24576
    %985 = vst.msk [vmem:[#allocation5] sm:$0x1] %vm984, %v981
    // Predicated region
    $region14: #{tpu_custom_call.1} parent=1 // pred_check
      _
    $region15: #{tpu_custom_call.1} parent=1 // pred_check_branch
      %987 = sbr.rel (0) target = $region17
    $region16: #{tpu_custom_call.1} parent=1 // pred_region
      %s989 = ssub.s32 16, 16
      %990 = vsyncadd [#allocation4], %s989
      %s992 = sshll.u32 [#allocation5], 4
      %s993 = int_to_ptr.vmem [resolvable:$true] %s992
      %995 = dma.vmem_to_hbm [thread:$0]  %s993, 16, %s2, [#allocation4]
    $region17: #{tpu_custom_call.1} parent=1 // pred_fallthru
      _
    // Predicated region
    $region18: #{tpu_custom_call.1} parent=1 // pred_check
      _
    $region19: #{tpu_custom_call.1} parent=1 // pred_check_branch
      %997 = sbr.rel (0) target = $region21
    $region20: #{tpu_custom_call.1} parent=1 // pred_region
      %998 = dma.done [#allocation4], 16
    $region21: #{tpu_custom_call.1} parent=1 // pred_fallthru
      _
    %999 = vsyncpa [#allocation3], 1
    %1000 = vsyncpa [#allocation4], 1

</llo_original>
